<compile_context>
chip_gen: v5e
topology: v5e:2x2
jax: 0.10.0
libtpu: 0.0.40
codegen_flags: <defaults>
</compile_context>

<pallas_src>
import math

import jax
import jax.numpy as jnp
import numpy as np
from jax.experimental import pallas as pl
from jax.experimental.pallas import tpu as pltpu


def _spatial_softmax_kernel(x_ref, wbd_ref, pos_ref, o_ref):
    # x_ref:   (bt*C, HW)    batch tile of feature maps, rows ordered (b, c)
    # wbd_ref: (bt*K, bt*C)  block-diagonal 1x1-conv weight (w on each diag block)
    # pos_ref: (2, HW)       lane-dense coord grid; row 0 = x, row 1 = y
    # o_ref:   (bt*K, 2)     expected keypoints, rows ordered (b, k), cols (x, y)

    # 1x1 conv for the WHOLE batch tile as a single MXU pass (block-diagonal
    # weight => contraction dim bt*C, no per-b fill/drain bubbles). Conv bias
    # omitted: softmax over HW is invariant to a per-row constant, so it
    # cancels exactly.
    feat = jnp.dot(wbd_ref[...], x_ref[...],
                   preferred_element_type=jnp.float32)          # (bt*K, HW) f32

    # Numerically-stable softmax numerator; normalization deferred to the
    # (bt*K, 1) reductions (expectation is linear), so no (bt*K, HW) divide.
    m = jnp.max(feat, axis=-1, keepdims=True)                   # (bt*K, 1)
    e = jnp.exp(feat - m)                                       # (bt*K, HW)
    denom = jnp.sum(e, axis=-1, keepdims=True)                  # (bt*K, 1), >= 1

    # Un-normalized expectations: VPU broadcast-multiply + XLU lane reduction
    # (keeps the degenerate N=2 matmul off the MXU at the small default HW).
    px = pos_ref[0:1, :]                                        # (1, HW)
    py = pos_ref[1:2, :]                                        # (1, HW)
    ex = jnp.sum(e * px, axis=-1, keepdims=True)                # (bt*K, 1)
    ey = jnp.sum(e * py, axis=-1, keepdims=True)                # (bt*K, 1)

    # Single EUP approximate reciprocal on the whole tile + one Newton step on
    # the tiny (bt*K, 1) slab to recover ~f32 accuracy.
    inv = pl.reciprocal(denom, approx=True)
    inv = inv * (2.0 - denom * inv)

    o_ref[:, 0:1] = ex * inv
    o_ref[:, 1:2] = ey * inv


def make_pos_grid(h: int, w: int) -> jnp.ndarray:
    # Same values as the PyTorch buffer (meshgrid of linspace(-1,1)), stored
    # lane-dense as (2, H*W): row 0 = x coords, row 1 = y coords.
    pos_x, pos_y = np.meshgrid(np.linspace(-1.0, 1.0, w),
                               np.linspace(-1.0, 1.0, h))
    grid = np.stack([pos_x.reshape(-1), pos_y.reshape(-1)], axis=0)
    return jnp.asarray(grid, dtype=jnp.float32)


def _chip_params():
    """(tensorcores_per_chip, VMEM tiling budget in bytes) — generation aware."""
    kind = ""
    try:
        kind = jax.devices()[0].device_kind.lower()
    except Exception:  # pragma: no cover - CPU/interpret fallbacks
        pass
    if ("v7" in kind) or ("tpu7" in kind):
        return 2, 24 << 20          # v7x: 2 TCs, only 64 MiB physical VMEM
    if "v6" in kind:
        return 1, 48 << 20          # v6e: single TC, 128 MiB VMEM -> big tiles
    return 1, 16 << 20              # v5e & unknown: conservative (16 MiB scoped)


def _choose_block_b(B, C, K, HW, *, n_cores, vmem_budget_bytes):
    # Per batch element (f32): double-buffered input rows + (K, HW) feat/exp
    # temps (+ slack for the broadcast products). Output block is negligible
    # but is accounted for in the vmem_limit estimate in the wrapper.
    per_b = 4 * (2 * C * HW + 3 * K * HW)
    bt = max(1, min(B, vmem_budget_bytes // per_b))
    if n_cores > 1 and B > 1:
        # Only split the batch when the chip actually has >1 TensorCore (v7x);
        # on v5e/v6e the forced extra grid step is pure overhead.
        bt = min(bt, -(-B // n_cores))
    if bt < B:
        # Grid has >1 step, so block dims must be sublane-aligned:
        # bt*C % 8 == 0 (input block) and bt*K % 8 == 0 (output block).
        need = math.lcm(8 // math.gcd(C, 8), 8 // math.gcd(K, 8))
        bt = (bt // need) * need
        if bt == 0:
            bt = need
        if bt >= B:
            bt = B                   # single step: block == full array, no constraint
    return bt


def spatial_softmax(features: jnp.ndarray,
                    conv_w: jnp.ndarray | None,
                    conv_b: jnp.ndarray | None = None,
                    pos_grid: jnp.ndarray | None = None,
                    *, block_b: int | None = None) -> jnp.ndarray:
    """
    Args:
      features: (B, C, H, W) float feature maps (NCHW, same as PyTorch).
      conv_w:   (K, C) weight of the 1x1 conv (kernel dims squeezed), or None
                for the num_kp=None identity path.
      conv_b:   (K,)   bias of the 1x1 conv — accepted for interface parity but
                mathematically a no-op (softmax is shift-invariant per channel).
      pos_grid: (2, H*W) lane-dense coordinate grid (row 0 = x, row 1 = y).
    Returns:
      (B, K, 2) expected keypoint coordinates, last dim = (x, y).
    """
    B, C, H, W = features.shape
    HW = H * W
    if conv_w is None:
        conv_w = jnp.eye(C, dtype=jnp.float32)     # num_kp=None => identity mix
    K = conv_w.shape[0]
    if pos_grid is None:
        pos_grid = make_pos_grid(H, W)
    assert pos_grid.shape == (2, HW), "pos_grid must be lane-dense (2, H*W)"
    del conv_b  # cancels exactly in the softmax; dropping it removes dead compute/DMA

    n_cores, vmem_budget = _chip_params()
    bt = block_b if block_b is not None else _choose_block_b(
        B, C, K, HW, n_cores=n_cores, vmem_budget_bytes=vmem_budget)
    nb = pl.cdiv(B, bt)
    bpad = nb * bt

    # Keep bf16 feature maps in bf16 for the (dominant) input DMA; everything
    # downstream of the matmul accumulates / reduces in f32.
    in_dtype = features.dtype
    if in_dtype not in (jnp.float32, jnp.bfloat16):
        in_dtype = jnp.float32

    # 2-D (B*C, HW) layout: input block (bt*C, HW) has no sublane padding for
    # small C (the 3-D (bt, C, HW) block padded C=4 -> 8 sublanes).
    x = features.reshape(B * C, HW).astype(in_dtype)
    if bpad != B:
        # Zero padding is safe: padded rows produce finite (uniform-softmax)
        # keypoints that are sliced away below.
        x = jnp.pad(x, ((0, (bpad - B) * C), (0, 0)))

    # Block-diagonal weight: one matmul channel-mixes the whole batch tile.
    wbd = jnp.kron(jnp.eye(bt, dtype=jnp.float32),
                   conv_w.astype(jnp.float32)).astype(in_dtype)

    # Explicit scoped-VMEM limit: actual buffer estimate (incl. double-buffered
    # output, weight, pos grid) with 2x headroom for compiler-internal scratch.
    isz = jnp.dtype(in_dtype).itemsize
    vmem_est = (2 * bt * C * HW * isz          # double-buffered input block
                + bt * K * bt * C * isz        # block-diagonal weight
                + 2 * HW * 4                   # pos grid
                + 3 * bt * K * HW * 4          # feat / e / broadcast products
                + 2 * bt * K * 2 * 4)          # double-buffered output block
    vmem_limit = int(min(max(2 * vmem_est + (2 << 20), 16 << 20), 48 << 20))

    out = pl.pallas_call(
        _spatial_softmax_kernel,
        out_shape=jax.ShapeDtypeStruct((bpad * K, 2), jnp.float32),
        grid_spec=pltpu.PrefetchScalarGridSpec(
            num_scalar_prefetch=0,
            grid=(nb,),
            in_specs=[
                pl.BlockSpec((bt * C, HW), lambda i: (i, 0)),        # batch tile
                pl.BlockSpec((bt * K, bt * C), lambda i: (0, 0)),    # block-diag weight
                pl.BlockSpec((2, HW), lambda i: (0, 0)),             # pos grid
            ],
            out_specs=pl.BlockSpec((bt * K, 2), lambda i: (i, 0)),
        ),
        compiler_params=pltpu.CompilerParams(
            dimension_semantics=("parallel",),
            vmem_limit_bytes=vmem_limit),
    )(x, wbd, pos_grid.astype(jnp.float32))

    # (bpad*K, 2) rows are (b, k)-ordered -> (B, K, 2), last dim (x, y).
    return out.reshape(bpad, K, 2)[:B]


def _reference(features, conv_w, conv_b, pos_grid_2xHW):
    # Pure-JAX reference matching the PyTorch forward (bias included, to verify
    # that dropping it in the kernel is exact).
    B, C, H, W = features.shape
    x = features.reshape(B, C, H * W).astype(jnp.float32)
    feat = jnp.einsum("kc,bcs->bks", conv_w, x) + conv_b[None, :, None]
    attn = jax.nn.softmax(feat, axis=-1)
    return jnp.einsum("bks,ds->bkd", attn, pos_grid_2xHW)


if __name__ == "__main__":
    # Small shapes consistent with the module: input_shape=(C=4, H=16, W=16), num_kp=8
    B, C, H, W, K = 2, 4, 16, 16, 8

    key = jax.random.PRNGKey(0)
    k_feat, k_w, k_b = jax.random.split(key, 3)

    features = jax.random.normal(k_feat, (B, C, H, W), dtype=jnp.float32)

    # 1x1-conv params (weight (K, C, 1, 1) squeezed to (K, C), bias (K,))
    fan_in = C  # kernel_size = 1
    bound = 1.0 / np.sqrt(fan_in)
    conv_w = jax.random.uniform(k_w, (K, C), minval=-bound, maxval=bound,
                                dtype=jnp.float32)
    conv_b = jax.random.uniform(k_b, (K,), minval=-bound, maxval=bound,
                                dtype=jnp.float32)

    pos_grid = make_pos_grid(H, W)

    out = spatial_softmax(features, conv_w, conv_b, pos_grid)
    out = jax.block_until_ready(out)

    ref = _reference(features, conv_w, conv_b, pos_grid)
    assert out.shape == (B, K, 2)
    # Tolerance leaves margin for the EUP approximate-reciprocal path (Newton
    # refined); coordinates live in [-1, 1] so this is still a tight check.
    assert jnp.allclose(out, ref, atol=1e-4, rtol=1e-4), \
        float(jnp.max(jnp.abs(out - ref)))

    print("KERNEL_OK")
</pallas_src>

<mosaic_0001>
module attributes {stable_mosaic.version = 11 : i64} {
  func.func @_spatial_softmax_kernel(%arg0: i32, %arg1: memref<8x256xf32, #tpu.memory_space<vmem>>, %arg2: memref<16x8xf32, #tpu.memory_space<vmem>>, %arg3: memref<2x256xf32, #tpu.memory_space<vmem>>, %arg4: memref<16x2xf32, #tpu.memory_space<vmem>>) attributes {dimension_semantics = [#tpu.dimension_semantics<parallel>], iteration_bounds = array<i64: 1>, scalar_prefetch = 0 : i64, scratch_operands = 0 : i64, tpu.core_type = #tpu.core_type<tc>, window_params = [{transform_indices = @transform_0, window_bounds = array<i64: 8, 256>}, {pipeline_mode = #tpu.pipeline_mode<synchronous>, transform_indices = @transform_1, window_bounds = array<i64: 16, 8>}, {pipeline_mode = #tpu.pipeline_mode<synchronous>, transform_indices = @transform_2, window_bounds = array<i64: 2, 256>}, {transform_indices = @transform_3, window_bounds = array<i64: 16, 2>}]} {
    %c0 = arith.constant 0 : index
    %c0_0 = arith.constant 0 : index
    %0 = vector.load %arg2[%c0, %c0_0] : memref<16x8xf32, #tpu.memory_space<vmem>>, vector<16x8xf32>
    %c0_1 = arith.constant 0 : index
    %c0_2 = arith.constant 0 : index
    %1 = vector.load %arg1[%c0_1, %c0_2] : memref<8x256xf32, #tpu.memory_space<vmem>>, vector<8x256xf32>
    %cst = arith.constant dense<0.000000e+00> : vector<16x256xf32>
    %2 = tpu.matmul %0, %1, %cst {dimension_numbers = #tpu.dot_dimension_numbers<[1], [0], [0], [1], [0, 0, 1, 1], [], []>} : vector<16x8xf32>, vector<8x256xf32>, vector<16x256xf32> -> vector<16x256xf32>
    %cst_3 = arith.constant dense<0xFF800000> : vector<16xf32>
    %3 = vector.multi_reduction <maximumf>, %2, %cst_3 [1] : vector<16x256xf32> to vector<16xf32>
    %4 = vector.shape_cast %3 : vector<16xf32> to vector<16x1xf32>
    %5 = vector.broadcast %4 : vector<16x1xf32> to vector<16x256xf32>
    %6 = arith.subf %2, %5 : vector<16x256xf32>
    %7 = math.exp %6 : vector<16x256xf32>
    %cst_4 = arith.constant dense<0.000000e+00> : vector<16xf32>
    %8 = vector.multi_reduction <add>, %7, %cst_4 [1] : vector<16x256xf32> to vector<16xf32>
    %9 = vector.shape_cast %8 : vector<16xf32> to vector<16x1xf32>
    %c0_5 = arith.constant 0 : index
    %c0_6 = arith.constant 0 : index
    %10 = vector.load %arg3[%c0_5, %c0_6] : memref<2x256xf32, #tpu.memory_space<vmem>>, vector<1x256xf32>
    %c1 = arith.constant 1 : index
    %c0_7 = arith.constant 0 : index
    %11 = vector.load %arg3[%c1, %c0_7] : memref<2x256xf32, #tpu.memory_space<vmem>>, vector<1x256xf32>
    %12 = vector.broadcast %10 : vector<1x256xf32> to vector<16x256xf32>
    %13 = arith.mulf %7, %12 : vector<16x256xf32>
    %cst_8 = arith.constant dense<0.000000e+00> : vector<16xf32>
    %14 = vector.multi_reduction <add>, %13, %cst_8 [1] : vector<16x256xf32> to vector<16xf32>
    %15 = vector.shape_cast %14 : vector<16xf32> to vector<16x1xf32>
    %16 = vector.broadcast %11 : vector<1x256xf32> to vector<16x256xf32>
    %17 = arith.mulf %7, %16 : vector<16x256xf32>
    %cst_9 = arith.constant dense<0.000000e+00> : vector<16xf32>
    %18 = vector.multi_reduction <add>, %17, %cst_9 [1] : vector<16x256xf32> to vector<16xf32>
    %19 = vector.shape_cast %18 : vector<16xf32> to vector<16x1xf32>
    %20 = tpu.reciprocal %9 {approx = true} : vector<16x1xf32> -> vector<16x1xf32>
    %21 = arith.mulf %9, %20 : vector<16x1xf32>
    %cst_10 = arith.constant 2.000000e+00 : f32
    %22 = vector.broadcast %cst_10 : f32 to vector<16x1xf32>
    %23 = arith.subf %22, %21 : vector<16x1xf32>
    %24 = arith.mulf %20, %23 : vector<16x1xf32>
    %25 = arith.mulf %15, %24 : vector<16x1xf32>
    %c0_11 = arith.constant 0 : index
    %c0_12 = arith.constant 0 : index
    %26 = vector.load %arg4[%c0_11, %c0_12] : memref<16x2xf32, #tpu.memory_space<vmem>>, vector<16x1xf32>
    tpu.vector_store %arg4[%c0_11, %c0_12], %25 {strides = array<i32>} : memref<16x2xf32, #tpu.memory_space<vmem>>, vector<16x1xf32>,
    %27 = arith.mulf %19, %24 : vector<16x1xf32>
    %c0_13 = arith.constant 0 : index
    %c1_14 = arith.constant 1 : index
    %28 = vector.load %arg4[%c0_13, %c1_14] : memref<16x2xf32, #tpu.memory_space<vmem>>, vector<16x1xf32>
    tpu.vector_store %arg4[%c0_13, %c1_14], %27 {strides = array<i32>} : memref<16x2xf32, #tpu.memory_space<vmem>>, vector<16x1xf32>,
    return
  }
  func.func @transform_0(%arg0: i32) -> (i32, i32) {
    %c0_i32 = arith.constant 0 : i32
    %c0_i32_0 = arith.constant 0 : i32
    return %arg0, %c0_i32 : i32, i32
  }
  func.func @transform_1(%arg0: i32) -> (i32, i32) {
    %c0_i32 = arith.constant 0 : i32
    %c0_i32_0 = arith.constant 0 : i32
    %c0_i32_1 = arith.constant 0 : i32
    return %c0_i32, %c0_i32_0 : i32, i32
  }
  func.func @transform_2(%arg0: i32) -> (i32, i32) {
    %c0_i32 = arith.constant 0 : i32
    %c0_i32_0 = arith.constant 0 : i32
    %c0_i32_1 = arith.constant 0 : i32
    return %c0_i32, %c0_i32_0 : i32, i32
  }
  func.func @transform_3(%arg0: i32) -> (i32, i32) {
    %c0_i32 = arith.constant 0 : i32
    %c0_i32_0 = arith.constant 0 : i32
    return %arg0, %c0_i32 : i32, i32
  }
}

</mosaic_0001>

<llo_original>
// kernel: tpu_custom_call.1
$region0: #{tpu_custom_call.1}
  #allocation0 [shape = 'u32[]', space=smem, size = 0x4, offset = 0x4, fixed_abs, tag = 'smem constant byte address 0x4 - core index']
  #allocation1 [shape = 'u32[72,128]{1,0:T(1,128)}', space=vmem, size = 0x9000, scoped, tag = 'internal scratch']
  %s0 = inlined_call_operand.vmem [shape: f32[8,256], index: 0, kind: input, shape index: {}]
  %s1 = inlined_call_operand.vmem [shape: f32[16,8], index: 1, kind: input, shape index: {}]
  %s2 = inlined_call_operand.vmem [shape: f32[2,256], index: 2, kind: input, shape index: {}]
  %s3 = inlined_call_operand.vmem [shape: f32[16,2], index: 3, kind: output, shape index: {}]
  %s4 = sld [smem:[#allocation0]]
  $region22: #{tpu_custom_call.1} parent=0
    _
  %s6 = ssub.s32 1, %s4
  %s7 = scalar_select 0, %s6, %s4
  // Predicated region
  $region2: #{tpu_custom_call.1} parent=0 // pred_check
    _
  $region3: #{tpu_custom_call.1} parent=0 // pred_check_branch
    %9 = sbr.rel (0) target = $region5
  $region4: #{tpu_custom_call.1} parent=0 // pred_region
    _
  $region5: #{tpu_custom_call.1} parent=0 // pred_fallthru
    _
  // Predicated region
  $region6: #{tpu_custom_call.1} parent=0 // pred_check
    _
  $region7: #{tpu_custom_call.1} parent=0 // pred_check_branch
    %11 = sbr.rel (0) target = $region9
  $region8: #{tpu_custom_call.1} parent=0 // pred_region
    _
  $region9: #{tpu_custom_call.1} parent=0 // pred_fallthru
    _
  // Predicated region
  $region10: #{tpu_custom_call.1} parent=0 // pred_check
    _
  $region11: #{tpu_custom_call.1} parent=0 // pred_check_branch
    %13 = sbr.rel (0) target = $region13
  $region12: #{tpu_custom_call.1} parent=0 // pred_region
    _
  $region13: #{tpu_custom_call.1} parent=0 // pred_fallthru
    _
  %v14 = vld [vmem:[%s1] sm:$0xff]
  %v15 = vld [vmem:[%s1 + $0x8] sm:$0xff]
  %v16 = vld [vmem:[%s0] sm:$0xff]
  %v17 = vld [vmem:[%s0 + $0x8] sm:$0xff]
  %vm18 = vcmask 64512
  %v20 = vsel %vm18, %v14, 0
  %v23 = vsel %vm18, %v15, 0
  %25 = vmatpush.msra.mxu0 0.0
  %26 = vmatpush.msra.mxu0 0.0
  %27 = vmatpush.msra.mxu0 0.0
  %28 = vmatpush.msra.mxu0 0.0
  %29 = vmatpush.msra.mxu0 0.0
  %30 = vmatpush.msra.mxu0 0.0
  %31 = vmatpush.msra.mxu0 0.0
  %32 = vmatpush.msra.mxu0 0.0
  %33 = vmatpush.msra.mxu0 0.0
  %34 = vmatpush.msra.mxu0 0.0
  %35 = vmatpush.msra.mxu0 0.0
  %36 = vmatpush.msra.mxu0 0.0
  %37 = vmatpush.msra.mxu0 0.0
  %38 = vmatpush.msra.mxu0 0.0
  %39 = vmatpush.msra.mxu0 0.0
  %40 = vmatpush.msra.mxu0 %v16
  %41 = vmatmul.f32.gmra.mxu0 %v20
  %v42 = vpop.f32.mrf.mxu0
  %v43 = vadd.f32 0.0, %v42
  %44 = vmatmul.f32.gmra.mxu0 %v23
  %v45 = vpop.f32.mrf.mxu0
  %v46 = vadd.f32 0.0, %v45
  %47 = vdwg.mxu0
  %48 = vmatpush.msra.mxu0 0.0
  %49 = vmatpush.msra.mxu0 0.0
  %50 = vmatpush.msra.mxu0 0.0
  %51 = vmatpush.msra.mxu0 0.0
  %52 = vmatpush.msra.mxu0 0.0
  %53 = vmatpush.msra.mxu0 0.0
  %54 = vmatpush.msra.mxu0 0.0
  %55 = vmatpush.msra.mxu0 0.0
  %56 = vmatpush.msra.mxu0 0.0
  %57 = vmatpush.msra.mxu0 0.0
  %58 = vmatpush.msra.mxu0 0.0
  %59 = vmatpush.msra.mxu0 0.0
  %60 = vmatpush.msra.mxu0 0.0
  %61 = vmatpush.msra.mxu0 0.0
  %62 = vmatpush.msra.mxu0 0.0
  %63 = vmatpush.msra.mxu0 %v17
  %64 = vmatmul.f32.gmra.mxu0 %v20
  %v65 = vpop.f32.mrf.mxu0
  %v66 = vadd.f32 0.0, %v65
  %67 = vmatmul.f32.gmra.mxu0 %v23
  %v68 = vpop.f32.mrf.mxu0
  %v69 = vadd.f32 0.0, %v68
  %70 = vdwg.mxu0
  %v71 = vmax.f32 %v43, %v66
  %72 = vmax.xlane.f32.xlu0 %v71
  %v73 = vpop.xlane.xlu0 %72
  %v74 = vmax.f32 %v46, %v69
  %75 = vmax.xlane.f32.xlu0 %v74
  %v76 = vpop.xlane.xlu0 %75
  %v77 = vsub.f32 %v43, %v73
  %v78 = vsub.f32 %v66, %v73
  %v79 = vsub.f32 %v46, %v76
  %v80 = vsub.f32 %v69, %v76
  %v81 = vmul.f32 %v77, 1.442695
  %v82 = vpow.pop %v81
  %v83 = vmul.f32 %v78, 1.442695
  %v84 = vpow.pop %v83
  %v85 = vmul.f32 %v79, 1.442695
  %v86 = vpow.pop %v85
  %v87 = vmul.f32 %v80, 1.442695
  %v88 = vpow.pop %v87
  %v89 = vadd.f32 %v82, %v84
  %90 = vadd.xlane.f32.xlu0 %v89
  %v91 = vpop.xlane.xlu0 %90
  %v92 = vadd.f32 %v86, %v88
  %93 = vadd.xlane.f32.xlu0 %v92
  %v94 = vpop.xlane.xlu0 %93
  %v95 = vld [vmem:[%s2] ss:$2 sm:$0x3]
  %s96 = scalar_lea.vmem %s2, 1
  %v97 = vld [vmem:[%s96] ss:$2 sm:$0x3]
  %v99 = vperm.slane %v95, 0
  %v100 = vperm.slane %v95, 1
  %v103 = vmul.f32 %v82, %v99
  %v104 = vmul.f32 %v84, %v100
  %v105 = vmul.f32 %v86, %v99
  %v106 = vmul.f32 %v88, %v100
  %v107 = vadd.f32 %v103, %v104
  %108 = vadd.xlane.f32.xlu0 %v107
  %v109 = vpop.xlane.xlu0 %108
  %v110 = vadd.f32 %v105, %v106
  %111 = vadd.xlane.f32.xlu0 %v110
  %v112 = vpop.xlane.xlu0 %111
  %v114 = vperm.slane %v97, 0
  %v115 = vperm.slane %v97, 1
  %v118 = vmul.f32 %v82, %v114
  %v119 = vmul.f32 %v84, %v115
  %v120 = vmul.f32 %v86, %v114
  %v121 = vmul.f32 %v88, %v115
  %v122 = vadd.f32 %v118, %v119
  %123 = vadd.xlane.f32.xlu0 %v122
  %v124 = vpop.xlane.xlu0 %123
  %v125 = vadd.f32 %v120, %v121
  %126 = vadd.xlane.f32.xlu0 %v125
  %v127 = vpop.xlane.xlu0 %126
  %v128 = vrcp.pop %v91
  %v129 = vrcp.pop %v94
  %v130 = vmul.f32 %v91, %v128
  %v131 = vmul.f32 %v94, %v129
  %v132 = vsub.f32 2.0, %v130
  %v133 = vsub.f32 2.0, %v131
  %v134 = vmul.f32 %v128, %v132
  %v135 = vmul.f32 %v129, %v133
  %v136 = vmul.f32 %v109, %v134
  %v137 = vmul.f32 %v112, %v135
  %vm138 = vcmask 7168
  %139 = vst.msk [vmem:[%s3] sm:$0xff] %vm138, %v136
  %140 = vst.msk [vmem:[%s3 + $0x8] sm:$0xff] %vm138, %v137
  %v141 = vmul.f32 %v124, %v134
  %v142 = vmul.f32 %v127, %v135
  %vm143 = vcmask 15368
  %144 = vst.msk [vmem:[%s3] sm:$0xff] %vm143, %v141
  %145 = vst.msk [vmem:[%s3 + $0x8] sm:$0xff] %vm143, %v142
  // Predicated region
  $region14: #{tpu_custom_call.1} parent=0 // pred_check
    _
  $region15: #{tpu_custom_call.1} parent=0 // pred_check_branch
    %147 = sbr.rel (0) target = $region17
  $region16: #{tpu_custom_call.1} parent=0 // pred_region
    _
  $region17: #{tpu_custom_call.1} parent=0 // pred_fallthru
    _
  // Predicated region
  $region18: #{tpu_custom_call.1} parent=0 // pred_check
    _
  $region19: #{tpu_custom_call.1} parent=0 // pred_check_branch
    %149 = sbr.rel (0) target = $region21
  $region20: #{tpu_custom_call.1} parent=0 // pred_region
    _
  $region21: #{tpu_custom_call.1} parent=0 // pred_fallthru
    _

</llo_original>
